<compile_context>
chip_gen: v7x
topology: tpu7x:2x2x1
jax: 0.10.0
libtpu: 0.0.40
codegen_flags: <defaults>
</compile_context>

<pallas_src>
import functools

import numpy as np

import jax
import jax.numpy as jnp
from jax.experimental import pallas as pl
from jax.experimental.pallas import tpu as pltpu


# ------------------------------ Pallas kernel -------------------------------

def mconv_bn_kernel(x_ref, b0_ref, b1_ref, b2_ref, sg_ref,
                    gamma_ref, beta_ref, out_ref, *, H):
    """Fused depthwise-3x3 + pointwise-1x1 + BatchNorm2d on a lane-dense slab.

    x_ref          : (N*H, W*C_in)    row = (n, h), lane = (w, ci)
    b0/b1/b2       : (W*C_in, W*C_out) banded matrices of the combined conv
                     kernel, one per kh tap (consume row h-1 / h / h+1)
    sg_ref         : (W*C_out, W*C_out) per-channel mean matrix: reduce over
                     the W lane-groups, scale by 1/(N*H*W), broadcast to lanes
    gamma/beta     : (1, W*C_out)     BN affine params tiled across W
    out_ref        : (N*H, W*C_out)
    """
    dot = lambda a, b: jnp.dot(a, b, preferred_element_type=jnp.float32)

    x = x_ref[...]                                   # (M, W*C_in)
    M = x.shape[0]

    # h index of every slab row (row = (n, h)).  Rows with h == 0 / h == H-1
    # must see zeros from the +/-1 shift: that is simultaneously the conv's
    # zero padding along H and the "never leak across the batch dim" guard.
    h_idx = jax.lax.broadcasted_iota(jnp.int32, x.shape, 0) % H

    # +/-1 row shifts via the XLU (sublane rotate); wrapped-around rows are
    # exactly the masked ones, so the wrap is harmless.
    x_prev = jnp.where(h_idx > 0, pltpu.roll(x, 1, axis=0), 0.0)       # x[n, h-1]
    x_next = jnp.where(h_idx < H - 1, pltpu.roll(x, M - 1, axis=0), 0.0)  # x[n, h+1]

    # Depthwise 3x3 + pointwise 1x1 fused into three banded matmuls
    # (combined kernel K[kh, kw, ci, co] = dw[ci, kh, kw] * pw[co, ci]).
    y = dot(x_prev, b0_ref[...]) + dot(x, b1_ref[...]) + dot(x_next, b2_ref[...])

    # BatchNorm2d (training-mode biased batch statistics), single pass:
    # per-lane sum / sum-of-squares, then channel reduce + broadcast via MXU.
    s1 = jnp.sum(y, axis=0, keepdims=True)           # (1, W*C_out)
    s2 = jnp.sum(y * y, axis=0, keepdims=True)
    mean = dot(s1, sg_ref[...])                      # E[y]   per channel, lane-broadcast
    ex2 = dot(s2, sg_ref[...])                       # E[y^2] per channel, lane-broadcast
    var = ex2 - mean * mean
    scale = jax.lax.rsqrt(var + 1e-5) * gamma_ref[...]
    shift = beta_ref[...] - mean * scale

    # act = Identity in the reference module, so nothing after the affine.
    out_ref[...] = y * scale + shift


# ------------------------- parameter preprocessing --------------------------

def prepare_params(dw_w, pw_w, gamma, beta, N, H, W):
    """Precompute the constant matrices the kernel needs (done once per model).

    dw_w  : (C_in, 3, 3)   depthwise weights (PyTorch (C_in, 1, 3, 3) squeezed)
    pw_w  : (C_out, C_in)  pointwise weights (PyTorch (C_out, C_in, 1, 1) squeezed)
    gamma : (C_out,)       BatchNorm weight
    beta  : (C_out,)       BatchNorm bias
    """
    C_in = dw_w.shape[0]
    C_out = pw_w.shape[0]
    WCi, WCo = W * C_in, W * C_out

    # Combined dense 3x3 kernel: K[kh, kw, ci, co] = dw[ci, kh, kw] * pw[co, ci].
    K = jnp.einsum('ckl,oc->klco', dw_w.astype(jnp.float32),
                   pw_w.astype(jnp.float32))

    # Banded (W*C_in, W*C_out) matrices, one per kh tap.  Entry
    # [w_in*C_in + ci, w_out*C_out + co] = K[kh, kw, ci, co], kw = w_in - w_out + 1
    # in {0,1,2}; out-of-range w_in is simply absent, which implements the
    # conv's zero padding along W.
    bands = []
    for kh in range(3):
        B = jnp.zeros((W, C_in, W, C_out), jnp.float32)
        for kw in range(3):
            d = kw - 1                                       # w_in = w_out + d
            w_out = np.arange(max(0, -d), W - max(0, d))
            w_in = w_out + d
            B = B.at[w_in, :, w_out, :].set(K[kh, kw])
        bands.append(B.reshape(WCi, WCo))
    b0, b1, b2 = bands

    # BN group matrix: lanes m and m' hold the same channel iff
    # m % C_out == m' % C_out; scaled by 1/(N*H*W) so one matmul gives the
    # per-channel mean already broadcast back onto every lane of that channel.
    m = np.arange(WCo)
    sg = ((m[:, None] % C_out) == (m[None, :] % C_out)).astype(np.float32)
    sg /= float(N * H * W)

    # TODO(synk): BatchNorm running_mean/running_var buffer updates (a training
    # side effect of forward, not part of the returned tensor) are not emitted.
    return dict(
        b0=b0, b1=b1, b2=b2,
        sg=jnp.asarray(sg),
        gamma_slab=jnp.tile(gamma.astype(jnp.float32), W).reshape(1, WCo),
        beta_slab=jnp.tile(beta.astype(jnp.float32), W).reshape(1, WCo),
    )


# --------------------------------- forward ----------------------------------

def mconv_norm_forward(x_nhwc, params):
    """MConvNormLayer forward.  x_nhwc: (N, H, W, C_in) float32, NHWC layout."""
    N, H, W, C_in = x_nhwc.shape
    WCo = params['gamma_slab'].shape[1]
    C_out = WCo // W

    # Lane-dense slab view: (N*H, W*C_in); last dim is a multiple of 128 for
    # the shapes below, so all kernel loads/stores are full-width.
    x_slab = x_nhwc.reshape(N * H, W * C_in)

    vmem = pl.BlockSpec(memory_space=pltpu.MemorySpace.VMEM)
    out_slab = pl.pallas_call(
        functools.partial(mconv_bn_kernel, H=H),
        out_shape=jax.ShapeDtypeStruct((N * H, WCo), jnp.float32),
        in_specs=[vmem] * 7,
        out_specs=vmem,
    )(x_slab, params['b0'], params['b1'], params['b2'], params['sg'],
      params['gamma_slab'], params['beta_slab'])

    return out_slab.reshape(N, H, W, C_out)


# ----------------------------------- main ------------------------------------

if __name__ == "__main__":
    key = jax.random.PRNGKey(0)
    N, H, W = 2, 16, 16
    C_in = C_out = 8          # W * C = 128  ->  exactly lane-dense slab

    k1, k2, k3, k4, k5 = jax.random.split(key, 5)
    x = jax.random.normal(k1, (N, H, W, C_in), jnp.float32)            # NHWC
    dw_w = 0.2 * jax.random.normal(k2, (C_in, 3, 3), jnp.float32)      # depthwise taps
    pw_w = 0.2 * jax.random.normal(k3, (C_out, C_in), jnp.float32)     # pointwise (Co, Ci)
    gamma = 1.0 + 0.1 * jax.random.normal(k4, (C_out,), jnp.float32)
    beta = 0.1 * jax.random.normal(k5, (C_out,), jnp.float32)

    params = prepare_params(dw_w, pw_w, gamma, beta, N, H, W)
    fwd = jax.jit(mconv_norm_forward)
    out = fwd(x, params)
    out = jax.block_until_ready(out)
    out_np = np.asarray(out, dtype=np.float64)

    # ---- float64 numpy reference (independent formulation) ------------------
    x64 = np.asarray(x, np.float64)
    dw64 = np.asarray(dw_w, np.float64)
    pw64 = np.asarray(pw_w, np.float64)
    g64 = np.asarray(gamma, np.float64)
    b64 = np.asarray(beta, np.float64)

    xp = np.pad(x64, ((0, 0), (1, 1), (1, 1), (0, 0)))
    dw_out = np.zeros((N, H, W, C_in), np.float64)
    for kh in range(3):
        for kw in range(3):
            dw_out += xp[:, kh:kh + H, kw:kw + W, :] * dw64[:, kh, kw]
    y_ref = np.einsum('nhwc,oc->nhwo', dw_out, pw64)
    mean_ref = y_ref.mean(axis=(0, 1, 2))
    var_ref = y_ref.var(axis=(0, 1, 2))                     # biased (training BN)
    ref = (y_ref - mean_ref) / np.sqrt(var_ref + 1e-5) * g64 + b64

    assert out.shape == (N, H, W, C_out), out.shape
    assert np.isfinite(out_np).all()
    # Tolerance allows for the TPU's default-precision (bf16-pass) MXU matmuls;
    # genuine indexing/semantics bugs produce O(1) errors and would fail this.
    max_err = np.max(np.abs(out_np - ref))
    assert max_err < 5e-2, max_err

    print("KERNEL_OK")
</pallas_src>

<mosaic_0001>
module attributes {stable_mosaic.version = 11 : i64} {
  func.func @mconv_bn_kernel(%arg0: memref<32x128xf32, #tpu.memory_space<vmem>>, %arg1: memref<128x128xf32, #tpu.memory_space<vmem>>, %arg2: memref<128x128xf32, #tpu.memory_space<vmem>>, %arg3: memref<128x128xf32, #tpu.memory_space<vmem>>, %arg4: memref<128x128xf32, #tpu.memory_space<vmem>>, %arg5: memref<1x128xf32, #tpu.memory_space<vmem>>, %arg6: memref<1x128xf32, #tpu.memory_space<vmem>>, %arg7: memref<32x128xf32, #tpu.memory_space<vmem>>) attributes {dimension_semantics = [], scalar_prefetch = 0 : i64, scratch_operands = 0 : i64, tpu.core_type = #tpu.core_type<tc>} {
    %c0 = arith.constant 0 : index
    %c0_0 = arith.constant 0 : index
    %0 = vector.load %arg0[%c0, %c0_0] : memref<32x128xf32, #tpu.memory_space<vmem>>, vector<32x128xf32>
    %1 = tpu.iota {dimensions = array<i32: 0>} : vector<32x128xi32>
    %c16_i32 = arith.constant 16 : i32
    %c0_i32 = arith.constant 0 : i32
    %2 = arith.cmpi eq, %c16_i32, %c0_i32 : i32
    %c1_i32 = arith.constant 1 : i32
    %3 = arith.select %2, %c1_i32, %c16_i32 : i32
    %4 = vector.broadcast %3 : i32 to vector<32x128xi32>
    %5 = arith.remsi %1, %4 : vector<32x128xi32>
    %c0_i32_1 = arith.constant 0 : i32
    %6 = vector.broadcast %c0_i32_1 : i32 to vector<32x128xi32>
    %7 = arith.cmpi ne, %5, %6 : vector<32x128xi32>
    %c0_i32_2 = arith.constant 0 : i32
    %8 = vector.broadcast %c0_i32_2 : i32 to vector<32x128xi32>
    %9 = arith.cmpi slt, %5, %8 : vector<32x128xi32>
    %c0_i32_3 = arith.constant 0 : i32
    %10 = arith.cmpi slt, %3, %c0_i32_3 : i32
    %11 = vector.broadcast %10 : i1 to vector<32x128xi1>
    %12 = vector.broadcast %11 : vector<32x128xi1> to vector<32x128xi1>
    %13 = arith.xori %9, %12 : vector<32x128xi1>
    %14 = arith.andi %13, %7 : vector<32x128xi1>
    %15 = vector.broadcast %3 : i32 to vector<32x128xi32>
    %16 = arith.addi %5, %15 : vector<32x128xi32>
    %17 = arith.select %14, %16, %5 : vector<32x128xi1>, vector<32x128xi32>
    %c0_i32_4 = arith.constant 0 : i32
    %18 = vector.broadcast %c0_i32_4 : i32 to vector<32x128xi32>
    %19 = arith.cmpi sgt, %17, %18 : vector<32x128xi32>
    %c1_i32_5 = arith.constant 1 : i32
    %20 = tpu.dynamic_rotate %0 by %c1_i32_5 dim 0 : vector<32x128xf32>, i32 -> vector<32x128xf32>
    %cst = arith.constant 0.000000e+00 : f32
    %21 = vector.broadcast %cst : f32 to vector<32x128xf32>
    %22 = arith.select %19, %20, %21 : vector<32x128xi1>, vector<32x128xf32>
    %c15_i32 = arith.constant 15 : i32
    %23 = vector.broadcast %c15_i32 : i32 to vector<32x128xi32>
    %24 = arith.cmpi slt, %17, %23 : vector<32x128xi32>
    %c31_i32 = arith.constant 31 : i32
    %25 = tpu.dynamic_rotate %0 by %c31_i32 dim 0 : vector<32x128xf32>, i32 -> vector<32x128xf32>
    %cst_6 = arith.constant 0.000000e+00 : f32
    %26 = vector.broadcast %cst_6 : f32 to vector<32x128xf32>
    %27 = arith.select %24, %25, %26 : vector<32x128xi1>, vector<32x128xf32>
    %c0_7 = arith.constant 0 : index
    %c0_8 = arith.constant 0 : index
    %28 = vector.load %arg1[%c0_7, %c0_8] : memref<128x128xf32, #tpu.memory_space<vmem>>, vector<128x128xf32>
    %cst_9 = arith.constant dense<0.000000e+00> : vector<32x128xf32>
    %29 = tpu.matmul %22, %28, %cst_9 {dimension_numbers = #tpu.dot_dimension_numbers<[1], [0], [0], [1], [0, 0, 1, 1], [], []>} : vector<32x128xf32>, vector<128x128xf32>, vector<32x128xf32> -> vector<32x128xf32>
    %c0_10 = arith.constant 0 : index
    %c0_11 = arith.constant 0 : index
    %30 = vector.load %arg2[%c0_10, %c0_11] : memref<128x128xf32, #tpu.memory_space<vmem>>, vector<128x128xf32>
    %cst_12 = arith.constant dense<0.000000e+00> : vector<32x128xf32>
    %31 = tpu.matmul %0, %30, %cst_12 {dimension_numbers = #tpu.dot_dimension_numbers<[1], [0], [0], [1], [0, 0, 1, 1], [], []>} : vector<32x128xf32>, vector<128x128xf32>, vector<32x128xf32> -> vector<32x128xf32>
    %32 = arith.addf %29, %31 : vector<32x128xf32>
    %c0_13 = arith.constant 0 : index
    %c0_14 = arith.constant 0 : index
    %33 = vector.load %arg3[%c0_13, %c0_14] : memref<128x128xf32, #tpu.memory_space<vmem>>, vector<128x128xf32>
    %cst_15 = arith.constant dense<0.000000e+00> : vector<32x128xf32>
    %34 = tpu.matmul %27, %33, %cst_15 {dimension_numbers = #tpu.dot_dimension_numbers<[1], [0], [0], [1], [0, 0, 1, 1], [], []>} : vector<32x128xf32>, vector<128x128xf32>, vector<32x128xf32> -> vector<32x128xf32>
    %35 = arith.addf %32, %34 : vector<32x128xf32>
    %cst_16 = arith.constant dense<0.000000e+00> : vector<128xf32>
    %36 = vector.multi_reduction <add>, %35, %cst_16 [0] : vector<32x128xf32> to vector<128xf32>
    %37 = vector.shape_cast %36 : vector<128xf32> to vector<1x128xf32>
    %38 = arith.mulf %35, %35 : vector<32x128xf32>
    %cst_17 = arith.constant dense<0.000000e+00> : vector<128xf32>
    %39 = vector.multi_reduction <add>, %38, %cst_17 [0] : vector<32x128xf32> to vector<128xf32>
    %40 = vector.shape_cast %39 : vector<128xf32> to vector<1x128xf32>
    %c0_18 = arith.constant 0 : index
    %c0_19 = arith.constant 0 : index
    %41 = vector.load %arg4[%c0_18, %c0_19] : memref<128x128xf32, #tpu.memory_space<vmem>>, vector<128x128xf32>
    %cst_20 = arith.constant dense<0.000000e+00> : vector<1x128xf32>
    %42 = tpu.matmul %37, %41, %cst_20 {dimension_numbers = #tpu.dot_dimension_numbers<[1], [0], [0], [1], [0, 0, 1, 1], [], []>} : vector<1x128xf32>, vector<128x128xf32>, vector<1x128xf32> -> vector<1x128xf32>
    %c0_21 = arith.constant 0 : index
    %c0_22 = arith.constant 0 : index
    %43 = vector.load %arg4[%c0_21, %c0_22] : memref<128x128xf32, #tpu.memory_space<vmem>>, vector<128x128xf32>
    %cst_23 = arith.constant dense<0.000000e+00> : vector<1x128xf32>
    %44 = tpu.matmul %40, %43, %cst_23 {dimension_numbers = #tpu.dot_dimension_numbers<[1], [0], [0], [1], [0, 0, 1, 1], [], []>} : vector<1x128xf32>, vector<128x128xf32>, vector<1x128xf32> -> vector<1x128xf32>
    %45 = arith.mulf %42, %42 : vector<1x128xf32>
    %46 = arith.subf %44, %45 : vector<1x128xf32>
    %cst_24 = arith.constant 9.99999974E-6 : f32
    %47 = vector.broadcast %cst_24 : f32 to vector<1x128xf32>
    %48 = arith.addf %46, %47 : vector<1x128xf32>
    %49 = math.rsqrt %48 : vector<1x128xf32>
    %c0_25 = arith.constant 0 : index
    %c0_26 = arith.constant 0 : index
    %50 = vector.load %arg5[%c0_25, %c0_26] : memref<1x128xf32, #tpu.memory_space<vmem>>, vector<1x128xf32>
    %51 = arith.mulf %49, %50 : vector<1x128xf32>
    %c0_27 = arith.constant 0 : index
    %c0_28 = arith.constant 0 : index
    %52 = vector.load %arg6[%c0_27, %c0_28] : memref<1x128xf32, #tpu.memory_space<vmem>>, vector<1x128xf32>
    %53 = arith.mulf %42, %51 : vector<1x128xf32>
    %54 = arith.subf %52, %53 : vector<1x128xf32>
    %55 = vector.broadcast %51 : vector<1x128xf32> to vector<32x128xf32>
    %56 = arith.mulf %35, %55 : vector<32x128xf32>
    %57 = vector.broadcast %54 : vector<1x128xf32> to vector<32x128xf32>
    %58 = arith.addf %56, %57 : vector<32x128xf32>
    %c0_29 = arith.constant 0 : index
    %c0_30 = arith.constant 0 : index
    %59 = vector.load %arg7[%c0_29, %c0_30] : memref<32x128xf32, #tpu.memory_space<vmem>>, vector<32x128xf32>
    tpu.vector_store %arg7[%c0_29, %c0_30], %58 {strides = array<i32>} : memref<32x128xf32, #tpu.memory_space<vmem>>, vector<32x128xf32>,
    return
  }
}

</mosaic_0001>

<llo_original>
// kernel: mconv_norm_forward.1
$region0: #{mconv_norm_forward.1}
  #allocation0 [shape = 'u32[]', space=smem, size = 0x4, offset = 0x4, fixed_abs, tag = 'smem constant byte address 0x4 - core index']
  #allocation1 [shape = 'u32[144,128]{1,0:T(1,128)}', space=vmem, size = 0x12000, scoped, tag = 'internal scratch']
  %s0 = inlined_call_operand.vmem [shape: f32[32,128], index: 0, kind: input, shape index: {}]
  %s1 = inlined_call_operand.vmem [shape: f32[128,128], index: 1, kind: input, shape index: {}]
  %s2 = inlined_call_operand.vmem [shape: f32[128,128], index: 2, kind: input, shape index: {}]
  %s3 = inlined_call_operand.vmem [shape: f32[128,128], index: 3, kind: input, shape index: {}]
  %s4 = inlined_call_operand.vmem [shape: f32[128,128], index: 4, kind: input, shape index: {}]
  %s5 = inlined_call_operand.vmem [shape: f32[1,128], index: 5, kind: input, shape index: {}]
  %s6 = inlined_call_operand.vmem [shape: f32[1,128], index: 6, kind: input, shape index: {}]
  %s7 = inlined_call_operand.vmem [shape: f32[32,128], index: 7, kind: output, shape index: {}]
  %s8 = sld [smem:[#allocation0]]
  $region38: #{mconv_norm_forward.1} parent=0
    _
  %s10 = ssub.s32 1, %s8
  %s11 = scalar_select 0, %s10, %s8
  // Predicated region
  $region2: #{mconv_norm_forward.1} parent=0 // pred_check
    _
  $region3: #{mconv_norm_forward.1} parent=0 // pred_check_branch
    %13 = sbr.rel (0) target = $region5
  $region4: #{mconv_norm_forward.1} parent=0 // pred_region
    _
  $region5: #{mconv_norm_forward.1} parent=0 // pred_fallthru
    _
  // Predicated region
  $region6: #{mconv_norm_forward.1} parent=0 // pred_check
    _
  $region7: #{mconv_norm_forward.1} parent=0 // pred_check_branch
    %15 = sbr.rel (0) target = $region9
  $region8: #{mconv_norm_forward.1} parent=0 // pred_region
    _
  $region9: #{mconv_norm_forward.1} parent=0 // pred_fallthru
    _
  // Predicated region
  $region10: #{mconv_norm_forward.1} parent=0 // pred_check
    _
  $region11: #{mconv_norm_forward.1} parent=0 // pred_check_branch
    %17 = sbr.rel (0) target = $region13
  $region12: #{mconv_norm_forward.1} parent=0 // pred_region
    _
  $region13: #{mconv_norm_forward.1} parent=0 // pred_fallthru
    _
  // Predicated region
  $region14: #{mconv_norm_forward.1} parent=0 // pred_check
    _
  $region15: #{mconv_norm_forward.1} parent=0 // pred_check_branch
    %19 = sbr.rel (0) target = $region17
  $region16: #{mconv_norm_forward.1} parent=0 // pred_region
    _
  $region17: #{mconv_norm_forward.1} parent=0 // pred_fallthru
    _
  // Predicated region
  $region18: #{mconv_norm_forward.1} parent=0 // pred_check
    _
  $region19: #{mconv_norm_forward.1} parent=0 // pred_check_branch
    %21 = sbr.rel (0) target = $region21
  $region20: #{mconv_norm_forward.1} parent=0 // pred_region
    _
  $region21: #{mconv_norm_forward.1} parent=0 // pred_fallthru
    _
  // Predicated region
  $region22: #{mconv_norm_forward.1} parent=0 // pred_check
    _
  $region23: #{mconv_norm_forward.1} parent=0 // pred_check_branch
    %23 = sbr.rel (0) target = $region25
  $region24: #{mconv_norm_forward.1} parent=0 // pred_region
    _
  $region25: #{mconv_norm_forward.1} parent=0 // pred_fallthru
    _
  // Predicated region
  $region26: #{mconv_norm_forward.1} parent=0 // pred_check
    _
  $region27: #{mconv_norm_forward.1} parent=0 // pred_check_branch
    %25 = sbr.rel (0) target = $region29
  $region28: #{mconv_norm_forward.1} parent=0 // pred_region
    _
  $region29: #{mconv_norm_forward.1} parent=0 // pred_fallthru
    _
  %v26 = vld [vmem:[%s0] sm:$0xff]
  %v27 = vld [vmem:[%s0 + $0x8] sm:$0xff]
  %v28 = vld [vmem:[%s0 + $0x10] sm:$0xff]
  %v29 = vld [vmem:[%s0 + $0x18] sm:$0xff]
  %v30 = vlaneseq
  %v31 = vshrl.u32 %v30, 7
  %v32 = vadd.s32 %v31, 8
  %v33 = vadd.s32 %v31, 16
  %v34 = vadd.s32 %v31, 24
  %vm35 = vcmp.lt.s32.totalorder %v31, 0
  %v36 = vsub.s32 0, %v31
  %v37 = vsel %vm35, %v36, %v31
  %v38 = vshrl.u32 %v37, 4
  %v39 = vand.u32 %v37, 15
  %v40 = vsub.s32 0, %v39
  %v41 = vsel %vm35, %v40, %v39
  %vm42 = vcmp.lt.s32.totalorder %v32, 0
  %v43 = vsub.s32 0, %v32
  %v44 = vsel %vm42, %v43, %v32
  %v45 = vshrl.u32 %v44, 4
  %v46 = vand.u32 %v44, 15
  %v47 = vsub.s32 0, %v46
  %v48 = vsel %vm42, %v47, %v46
  %vm49 = vcmp.lt.s32.totalorder %v33, 0
  %v50 = vsub.s32 0, %v33
  %v51 = vsel %vm49, %v50, %v33
  %v52 = vshrl.u32 %v51, 4
  %v53 = vand.u32 %v51, 15
  %v54 = vsub.s32 0, %v53
  %v55 = vsel %vm49, %v54, %v53
  %vm56 = vcmp.lt.s32.totalorder %v34, 0
  %v57 = vsub.s32 0, %v34
  %v58 = vsel %vm56, %v57, %v34
  %v59 = vshrl.u32 %v58, 4
  %v60 = vand.u32 %v58, 15
  %v61 = vsub.s32 0, %v60
  %v62 = vsel %vm56, %v61, %v60
  %vm63 = vcmp.ne.s32.totalorder %v41, 0
  %vm64 = vcmp.ne.s32.totalorder %v48, 0
  %vm65 = vcmp.ne.s32.totalorder %v55, 0
  %vm66 = vcmp.ne.s32.totalorder %v62, 0
  %vm67 = vcmp.lt.s32.totalorder %v41, 0
  %vm68 = vcmp.lt.s32.totalorder %v48, 0
  %vm69 = vcmp.lt.s32.totalorder %v55, 0
  %vm70 = vcmp.lt.s32.totalorder %v62, 0
  %vm71 = vmand %vm67, %vm63
  %vm72 = vmand %vm68, %vm64
  %vm73 = vmand %vm69, %vm65
  %vm74 = vmand %vm70, %vm66
  %v75 = vadd.s32 %v41, 16
  %v76 = vadd.s32 %v48, 16
  %v77 = vadd.s32 %v55, 16
  %v78 = vadd.s32 %v62, 16
  %v79 = vsel %vm71, %v75, %v41
  %v80 = vsel %vm72, %v76, %v48
  %v81 = vsel %vm73, %v77, %v55
  %v82 = vsel %vm74, %v78, %v62
  %vm83 = vcmp.gt.s32.totalorder %v79, 0
  %vm84 = vcmp.gt.s32.totalorder %v80, 0
  %vm85 = vcmp.gt.s32.totalorder %v81, 0
  %vm86 = vcmp.gt.s32.totalorder %v82, 0
  %v87 = vrot.slane %v26, 7
  %v88 = vrot.slane %v27, 7
  %v89 = vrot.slane %v28, 7
  %v90 = vrot.slane %v29, 7
  %vm91 = vcmp.lt.s32.totalorder %v31, 1
  %v92 = vsel %vm91, %v89, %v90
  %v93 = vsel %vm91, %v88, %v89
  %v94 = vsel %vm91, %v87, %v88
  %v95 = vsel %vm91, %v90, %v87
  %v96 = vsel %vm83, %v95, 0.0
  %v97 = vsel %vm84, %v94, 0.0
  %v98 = vsel %vm85, %v93, 0.0
  %v99 = vsel %vm86, %v92, 0.0
  %vm100 = vcmp.lt.s32.totalorder %v79, 15
  %vm101 = vcmp.lt.s32.totalorder %v80, 15
  %vm102 = vcmp.lt.s32.totalorder %v81, 15
  %vm103 = vcmp.lt.s32.totalorder %v82, 15
  %v104 = vrot.slane %v26, 1
  %v105 = vrot.slane %v27, 1
  %v106 = vrot.slane %v28, 1
  %v107 = vrot.slane %v29, 1
  %vm108 = vcmp.lt.s32.totalorder %v31, 7
  %v109 = vsel %vm108, %v106, %v107
  %v110 = vsel %vm108, %v105, %v106
  %v111 = vsel %vm108, %v104, %v105
  %v112 = vsel %vm108, %v107, %v104
  %v113 = vsel %vm100, %v111, 0.0
  %v114 = vsel %vm101, %v110, 0.0
  %v115 = vsel %vm102, %v109, 0.0
  %v116 = vsel %vm103, %v112, 0.0
  %v117 = vld [vmem:[%s1] sm:$0xff]
  %v118 = vld [vmem:[%s1 + $0x8] sm:$0xff]
  %v119 = vld [vmem:[%s1 + $0x10] sm:$0xff]
  %v120 = vld [vmem:[%s1 + $0x18] sm:$0xff]
  %v121 = vld [vmem:[%s1 + $0x20] sm:$0xff]
  %v122 = vld [vmem:[%s1 + $0x28] sm:$0xff]
  %v123 = vld [vmem:[%s1 + $0x30] sm:$0xff]
  %v124 = vld [vmem:[%s1 + $0x38] sm:$0xff]
  %v125 = vld [vmem:[%s1 + $0x40] sm:$0xff]
  %v126 = vld [vmem:[%s1 + $0x48] sm:$0xff]
  %v127 = vld [vmem:[%s1 + $0x50] sm:$0xff]
  %v128 = vld [vmem:[%s1 + $0x58] sm:$0xff]
  %v129 = vld [vmem:[%s1 + $0x60] sm:$0xff]
  %v130 = vld [vmem:[%s1 + $0x68] sm:$0xff]
  %v131 = vld [vmem:[%s1 + $0x70] sm:$0xff]
  %v132 = vld [vmem:[%s1 + $0x78] sm:$0xff]
  %v133 = vld [vmem:[%s2] sm:$0xff]
  %v134 = vld [vmem:[%s2 + $0x8] sm:$0xff]
  %v135 = vld [vmem:[%s2 + $0x10] sm:$0xff]
  %v136 = vld [vmem:[%s2 + $0x18] sm:$0xff]
  %v137 = vld [vmem:[%s2 + $0x20] sm:$0xff]
  %v138 = vld [vmem:[%s2 + $0x28] sm:$0xff]
  %v139 = vld [vmem:[%s2 + $0x30] sm:$0xff]
  %v140 = vld [vmem:[%s2 + $0x38] sm:$0xff]
  %v141 = vld [vmem:[%s2 + $0x40] sm:$0xff]
  %v142 = vld [vmem:[%s2 + $0x48] sm:$0xff]
  %v143 = vld [vmem:[%s2 + $0x50] sm:$0xff]
  %v144 = vld [vmem:[%s2 + $0x58] sm:$0xff]
  %v145 = vld [vmem:[%s2 + $0x60] sm:$0xff]
  %v146 = vld [vmem:[%s2 + $0x68] sm:$0xff]
  %v147 = vld [vmem:[%s2 + $0x70] sm:$0xff]
  %v148 = vld [vmem:[%s2 + $0x78] sm:$0xff]
  %149 = vmatprep.subr.mxu0 0.0
  %150 = vmatpush1.msra.mxu0 %v133
  %151 = vmatprep.subr.mxu0 0.0
  %152 = vmatpush1.msra.mxu0 %v134
  %153 = vmatprep.subr.mxu0 0.0
  %154 = vmatpush1.msra.mxu0 %v135
  %155 = vmatprep.subr.mxu0 0.0
  %156 = vmatpush1.msra.mxu0 %v136
  %157 = vmatprep.subr.mxu0 0.0
  %158 = vmatpush1.msra.mxu0 %v137
  %159 = vmatprep.subr.mxu0 0.0
  %160 = vmatpush1.msra.mxu0 %v138
  %161 = vmatprep.subr.mxu0 0.0
  %162 = vmatpush1.msra.mxu0 %v139
  %163 = vmatprep.subr.mxu0 0.0
  %164 = vmatpush1.msra.mxu0 %v140
  %165 = vmatprep.subr.mxu0 0.0
  %166 = vmatpush1.msra.mxu0 %v141
  %167 = vmatprep.subr.mxu0 0.0
  %168 = vmatpush1.msra.mxu0 %v142
  %169 = vmatprep.subr.mxu0 0.0
  %170 = vmatpush1.msra.mxu0 %v143
  %171 = vmatprep.subr.mxu0 0.0
  %172 = vmatpush1.msra.mxu0 %v144
  %173 = vmatprep.subr.mxu0 0.0
  %174 = vmatpush1.msra.mxu0 %v145
  %175 = vmatprep.subr.mxu0 0.0
  %176 = vmatpush1.msra.mxu0 %v146
  %177 = vmatprep.subr.mxu0 0.0
  %178 = vmatpush1.msra.mxu0 %v147
  %179 = vmatprep.subr.mxu0 0.0
  %180 = vmatpush1.msra.mxu0 %v148
  %181 = vmatprep.subr.mxu0 0.0
  %182 = vmatpush1.msra.mxu0 0.0
  %183 = vmatprep.subr.mxu0 0.0
  %184 = vmatpush1.msra.mxu0 0.0
  %185 = vmatprep.subr.mxu0 0.0
  %186 = vmatpush1.msra.mxu0 0.0
  %187 = vmatprep.subr.mxu0 0.0
  %188 = vmatpush1.msra.mxu0 0.0
  %189 = vmatprep.subr.mxu0 0.0
  %190 = vmatpush1.msra.mxu0 0.0
  %191 = vmatprep.subr.mxu0 0.0
  %192 = vmatpush1.msra.mxu0 0.0
  %193 = vmatprep.subr.mxu0 0.0
  %194 = vmatpush1.msra.mxu0 0.0
  %195 = vmatprep.subr.mxu0 0.0
  %196 = vmatpush1.msra.mxu0 0.0
  %197 = vmatprep.subr.mxu0 0.0
  %198 = vmatpush1.msra.mxu0 0.0
  %199 = vmatprep.subr.mxu0 0.0
  %200 = vmatpush1.msra.mxu0 0.0
  %201 = vmatprep.subr.mxu0 0.0
  %202 = vmatpush1.msra.mxu0 0.0
  %203 = vmatprep.subr.mxu0 0.0
  %204 = vmatpush1.msra.mxu0 0.0
  %205 = vmatprep.subr.mxu0 0.0
  %206 = vmatpush1.msra.mxu0 0.0
  %207 = vmatprep.subr.mxu0 0.0
  %208 = vmatpush1.msra.mxu0 0.0
  %209 = vmatprep.subr.mxu0 0.0
  %210 = vmatpush1.msra.mxu0 0.0
  %211 = vmatprep.subr.mxu0 0.0
  %212 = vmatpush1.msra.mxu0 0.0
  %213 = vmatprep.mubr.f32.mxu0 0.0
  %214 = vmatmul.mubr.f32.gmra.mrb[0].mxu0 %v26
  %v215 = vpop.f32.mrb[0].mxu0
  %v216 = vadd.f32 0.0, %v215
  %v217 = vpop.f32.mrb[0].mxu0
  %218 = vmatprep.mubr.f32.mxu0 0.0
  %219 = vmatmul.mubr.f32.gmra.mrb[0].mxu0 %v27
  %v220 = vpop.f32.mrb[0].mxu0
  %v221 = vadd.f32 0.0, %v220
  %v222 = vpop.f32.mrb[0].mxu0
  %223 = vmatprep.mubr.f32.mxu0 0.0
  %224 = vmatmul.mubr.f32.gmra.mrb[0].mxu0 %v28
  %v225 = vpop.f32.mrb[0].mxu0
  %v226 = vadd.f32 0.0, %v225
  %v227 = vpop.f32.mrb[0].mxu0
  %228 = vmatprep.mubr.f32.mxu0 0.0
  %229 = vmatmul.mubr.f32.gmra.mrb[0].mxu0 %v29
  %v230 = vpop.f32.mrb[0].mxu0
  %v231 = vadd.f32 0.0, %v230
  %v232 = vpop.f32.mrb[0].mxu0
  %233 = vdwg.mxu0
  %234 = vmatprep.subr.mxu0 0.0
  %235 = vmatpush1.msra.mxu0 %v117
  %236 = vmatprep.subr.mxu0 0.0
  %237 = vmatpush1.msra.mxu0 %v118
  %238 = vmatprep.subr.mxu0 0.0
  %239 = vmatpush1.msra.mxu0 %v119
  %240 = vmatprep.subr.mxu0 0.0
  %241 = vmatpush1.msra.mxu0 %v120
  %242 = vmatprep.subr.mxu0 0.0
  %243 = vmatpush1.msra.mxu0 %v121
  %244 = vmatprep.subr.mxu0 0.0
  %245 = vmatpush1.msra.mxu0 %v122
  %246 = vmatprep.subr.mxu0 0.0
  %247 = vmatpush1.msra.mxu0 %v123
  %248 = vmatprep.subr.mxu0 0.0
  %249 = vmatpush1.msra.mxu0 %v124
  %250 = vmatprep.subr.mxu0 0.0
  %251 = vmatpush1.msra.mxu0 %v125
  %252 = vmatprep.subr.mxu0 0.0
  %253 = vmatpush1.msra.mxu0 %v126
  %254 = vmatprep.subr.mxu0 0.0
  %255 = vmatpush1.msra.mxu0 %v127
  %256 = vmatprep.subr.mxu0 0.0
  %257 = vmatpush1.msra.mxu0 %v128
  %258 = vmatprep.subr.mxu0 0.0
  %259 = vmatpush1.msra.mxu0 %v129
  %260 = vmatprep.subr.mxu0 0.0
  %261 = vmatpush1.msra.mxu0 %v130
  %262 = vmatprep.subr.mxu0 0.0
  %263 = vmatpush1.msra.mxu0 %v131
  %264 = vmatprep.subr.mxu0 0.0
  %265 = vmatpush1.msra.mxu0 %v132
  %266 = vmatprep.subr.mxu0 0.0
  %267 = vmatpush1.msra.mxu0 0.0
  %268 = vmatprep.subr.mxu0 0.0
  %269 = vmatpush1.msra.mxu0 0.0
  %270 = vmatprep.subr.mxu0 0.0
  %271 = vmatpush1.msra.mxu0 0.0
  %272 = vmatprep.subr.mxu0 0.0
  %273 = vmatpush1.msra.mxu0 0.0
  %274 = vmatprep.subr.mxu0 0.0
  %275 = vmatpush1.msra.mxu0 0.0
  %276 = vmatprep.subr.mxu0 0.0
  %277 = vmatpush1.msra.mxu0 0.0
  %278 = vmatprep.subr.mxu0 0.0
  %279 = vmatpush1.msra.mxu0 0.0
  %280 = vmatprep.subr.mxu0 0.0
  %281 = vmatpush1.msra.mxu0 0.0
  %282 = vmatprep.subr.mxu0 0.0
  %283 = vmatpush1.msra.mxu0 0.0
  %284 = vmatprep.subr.mxu0 0.0
  %285 = vmatpush1.msra.mxu0 0.0
  %286 = vmatprep.subr.mxu0 0.0
  %287 = vmatpush1.msra.mxu0 0.0
  %288 = vmatprep.subr.mxu0 0.0
  %289 = vmatpush1.msra.mxu0 0.0
  %290 = vmatprep.subr.mxu0 0.0
  %291 = vmatpush1.msra.mxu0 0.0
  %292 = vmatprep.subr.mxu0 0.0
  %293 = vmatpush1.msra.mxu0 0.0
  %294 = vmatprep.subr.mxu0 0.0
  %295 = vmatpush1.msra.mxu0 0.0
  %296 = vmatprep.subr.mxu0 0.0
  %297 = vmatpush1.msra.mxu0 0.0
  %298 = vmatprep.mubr.f32.mxu0 0.0
  %299 = vmatmul.mubr.f32.gmra.mrb[0].mxu0 %v96
  %v300 = vpop.f32.mrb[0].mxu0
  %v301 = vadd.f32 %v216, %v300
  %v302 = vpop.f32.mrb[0].mxu0
  %303 = vmatprep.mubr.f32.mxu0 0.0
  %304 = vmatmul.mubr.f32.gmra.mrb[0].mxu0 %v97
  %v305 = vpop.f32.mrb[0].mxu0
  %v306 = vadd.f32 %v221, %v305
  %v307 = vpop.f32.mrb[0].mxu0
  %308 = vmatprep.mubr.f32.mxu0 0.0
  %309 = vmatmul.mubr.f32.gmra.mrb[0].mxu0 %v98
  %v310 = vpop.f32.mrb[0].mxu0
  %v311 = vadd.f32 %v226, %v310
  %v312 = vpop.f32.mrb[0].mxu0
  %313 = vmatprep.mubr.f32.mxu0 0.0
  %314 = vmatmul.mubr.f32.gmra.mrb[0].mxu0 %v99
  %v315 = vpop.f32.mrb[0].mxu0
  %v316 = vadd.f32 %v231, %v315
  %v317 = vpop.f32.mrb[0].mxu0
  %318 = vdwg.mxu0
  %v319 = vld [vmem:[%s3] sm:$0xff]
  %v320 = vld [vmem:[%s3 + $0x8] sm:$0xff]
  %v321 = vld [vmem:[%s3 + $0x10] sm:$0xff]
  %v322 = vld [vmem:[%s3 + $0x18] sm:$0xff]
  %v323 = vld [vmem:[%s3 + $0x20] sm:$0xff]
  %v324 = vld [vmem:[%s3 + $0x28] sm:$0xff]
  %v325 = vld [vmem:[%s3 + $0x30] sm:$0xff]
  %v326 = vld [vmem:[%s3 + $0x38] sm:$0xff]
  %v327 = vld [vmem:[%s3 + $0x40] sm:$0xff]
  %v328 = vld [vmem:[%s3 + $0x48] sm:$0xff]
  %v329 = vld [vmem:[%s3 + $0x50] sm:$0xff]
  %v330 = vld [vmem:[%s3 + $0x58] sm:$0xff]
  %v331 = vld [vmem:[%s3 + $0x60] sm:$0xff]
  %v332 = vld [vmem:[%s3 + $0x68] sm:$0xff]
  %v333 = vld [vmem:[%s3 + $0x70] sm:$0xff]
  %v334 = vld [vmem:[%s3 + $0x78] sm:$0xff]
  %335 = vmatprep.subr.mxu0 0.0
  %336 = vmatpush1.msra.mxu0 %v319
  %337 = vmatprep.subr.mxu0 0.0
  %338 = vmatpush1.msra.mxu0 %v320
  %339 = vmatprep.subr.mxu0 0.0
  %340 = vmatpush1.msra.mxu0 %v321
  %341 = vmatprep.subr.mxu0 0.0
  %342 = vmatpush1.msra.mxu0 %v322
  %343 = vmatprep.subr.mxu0 0.0
  %344 = vmatpush1.msra.mxu0 %v323
  %345 = vmatprep.subr.mxu0 0.0
  %346 = vmatpush1.msra.mxu0 %v324
  %347 = vmatprep.subr.mxu0 0.0
  %348 = vmatpush1.msra.mxu0 %v325
  %349 = vmatprep.subr.mxu0 0.0
  %350 = vmatpush1.msra.mxu0 %v326
  %351 = vmatprep.subr.mxu0 0.0
  %352 = vmatpush1.msra.mxu0 %v327
  %353 = vmatprep.subr.mxu0 0.0
  %354 = vmatpush1.msra.mxu0 %v328
  %355 = vmatprep.subr.mxu0 0.0
  %356 = vmatpush1.msra.mxu0 %v329
  %357 = vmatprep.subr.mxu0 0.0
  %358 = vmatpush1.msra.mxu0 %v330
  %359 = vmatprep.subr.mxu0 0.0
  %360 = vmatpush1.msra.mxu0 %v331
  %361 = vmatprep.subr.mxu0 0.0
  %362 = vmatpush1.msra.mxu0 %v332
  %363 = vmatprep.subr.mxu0 0.0
  %364 = vmatpush1.msra.mxu0 %v333
  %365 = vmatprep.subr.mxu0 0.0
  %366 = vmatpush1.msra.mxu0 %v334
  %367 = vmatprep.subr.mxu0 0.0
  %368 = vmatpush1.msra.mxu0 0.0
  %369 = vmatprep.subr.mxu0 0.0
  %370 = vmatpush1.msra.mxu0 0.0
  %371 = vmatprep.subr.mxu0 0.0
  %372 = vmatpush1.msra.mxu0 0.0
  %373 = vmatprep.subr.mxu0 0.0
  %374 = vmatpush1.msra.mxu0 0.0
  %375 = vmatprep.subr.mxu0 0.0
  %376 = vmatpush1.msra.mxu0 0.0
  %377 = vmatprep.subr.mxu0 0.0
  %378 = vmatpush1.msra.mxu0 0.0
  %379 = vmatprep.subr.mxu0 0.0
  %380 = vmatpush1.msra.mxu0 0.0
  %381 = vmatprep.subr.mxu0 0.0
  %382 = vmatpush1.msra.mxu0 0.0
  %383 = vmatprep.subr.mxu0 0.0
  %384 = vmatpush1.msra.mxu0 0.0
  %385 = vmatprep.subr.mxu0 0.0
  %386 = vmatpush1.msra.mxu0 0.0
  %387 = vmatprep.subr.mxu0 0.0
  %388 = vmatpush1.msra.mxu0 0.0
  %389 = vmatprep.subr.mxu0 0.0
  %390 = vmatpush1.msra.mxu0 0.0
  %391 = vmatprep.subr.mxu0 0.0
  %392 = vmatpush1.msra.mxu0 0.0
  %393 = vmatprep.subr.mxu0 0.0
  %394 = vmatpush1.msra.mxu0 0.0
  %395 = vmatprep.subr.mxu0 0.0
  %396 = vmatpush1.msra.mxu0 0.0
  %397 = vmatprep.subr.mxu0 0.0
  %398 = vmatpush1.msra.mxu0 0.0
  %399 = vmatprep.mubr.f32.mxu0 0.0
  %400 = vmatmul.mubr.f32.gmra.mrb[0].mxu0 %v113
  %v401 = vpop.f32.mrb[0].mxu0
  %v402 = vadd.f32 0.0, %v401
  %v403 = vpop.f32.mrb[0].mxu0
  %404 = vmatprep.mubr.f32.mxu0 0.0
  %405 = vmatmul.mubr.f32.gmra.mrb[0].mxu0 %v114
  %v406 = vpop.f32.mrb[0].mxu0
  %v407 = vadd.f32 0.0, %v406
  %v408 = vpop.f32.mrb[0].mxu0
  %409 = vmatprep.mubr.f32.mxu0 0.0
  %410 = vmatmul.mubr.f32.gmra.mrb[0].mxu0 %v115
  %v411 = vpop.f32.mrb[0].mxu0
  %v412 = vadd.f32 0.0, %v411
  %v413 = vpop.f32.mrb[0].mxu0
  %414 = vmatprep.mubr.f32.mxu0 0.0
  %415 = vmatmul.mubr.f32.gmra.mrb[0].mxu0 %v116
  %v416 = vpop.f32.mrb[0].mxu0
  %v417 = vadd.f32 0.0, %v416
  %v418 = vpop.f32.mrb[0].mxu0
  %419 = vdwg.mxu0
  %v420 = vadd.f32 %v301, %v402
  %v421 = vadd.f32 %v306, %v407
  %v422 = vadd.f32 %v311, %v412
  %v423 = vadd.f32 %v316, %v417
  %v424 = vadd.f32 %v420, %v421
  %v425 = vadd.f32 %v424, %v422
  %v426 = vadd.f32 %v425, %v423
  %v427 = vrot.slane %v426, 4
  %v428 = vadd.f32 %v426, %v427
  %v429 = vrot.slane %v428, 2
  %v430 = vadd.f32 %v428, %v429
  %v431 = vrot.slane %v430, 1
  %v432 = vadd.f32 %v430, %v431
  %v433 = vmul.f32 %v420, %v420
  %v434 = vmul.f32 %v421, %v421
  %v435 = vmul.f32 %v422, %v422
  %v436 = vmul.f32 %v423, %v423
  %v437 = vadd.f32 %v433, %v434
  %v438 = vadd.f32 %v437, %v435
  %v439 = vadd.f32 %v438, %v436
  %v440 = vrot.slane %v439, 4
  %v441 = vadd.f32 %v439, %v440
  %v442 = vrot.slane %v441, 2
  %v443 = vadd.f32 %v441, %v442
  %v444 = vrot.slane %v443, 1
  %v445 = vadd.f32 %v443, %v444
  %v446 = vld [vmem:[%s4] sm:$0xff]
  %v447 = vld [vmem:[%s4 + $0x8] sm:$0xff]
  %v448 = vld [vmem:[%s4 + $0x10] sm:$0xff]
  %v449 = vld [vmem:[%s4 + $0x18] sm:$0xff]
  %v450 = vld [vmem:[%s4 + $0x20] sm:$0xff]
  %v451 = vld [vmem:[%s4 + $0x28] sm:$0xff]
  %v452 = vld [vmem:[%s4 + $0x30] sm:$0xff]
  %v453 = vld [vmem:[%s4 + $0x38] sm:$0xff]
  %v454 = vld [vmem:[%s4 + $0x40] sm:$0xff]
  %v455 = vld [vmem:[%s4 + $0x48] sm:$0xff]
  %v456 = vld [vmem:[%s4 + $0x50] sm:$0xff]
  %v457 = vld [vmem:[%s4 + $0x58] sm:$0xff]
  %v458 = vld [vmem:[%s4 + $0x60] sm:$0xff]
  %v459 = vld [vmem:[%s4 + $0x68] sm:$0xff]
  %v460 = vld [vmem:[%s4 + $0x70] sm:$0xff]
  %v461 = vld [vmem:[%s4 + $0x78] sm:$0xff]
  %462 = vmatprep.subr.mxu0 0.0
  %463 = vmatpush1.msra.mxu0 %v446
  %464 = vmatprep.subr.mxu0 0.0
  %465 = vmatpush1.msra.mxu0 %v447
  %466 = vmatprep.subr.mxu0 0.0
  %467 = vmatpush1.msra.mxu0 %v448
  %468 = vmatprep.subr.mxu0 0.0
  %469 = vmatpush1.msra.mxu0 %v449
  %470 = vmatprep.subr.mxu0 0.0
  %471 = vmatpush1.msra.mxu0 %v450
  %472 = vmatprep.subr.mxu0 0.0
  %473 = vmatpush1.msra.mxu0 %v451
  %474 = vmatprep.subr.mxu0 0.0
  %475 = vmatpush1.msra.mxu0 %v452
  %476 = vmatprep.subr.mxu0 0.0
  %477 = vmatpush1.msra.mxu0 %v453
  %478 = vmatprep.subr.mxu0 0.0
  %479 = vmatpush1.msra.mxu0 %v454
  %480 = vmatprep.subr.mxu0 0.0
  %481 = vmatpush1.msra.mxu0 %v455
  %482 = vmatprep.subr.mxu0 0.0
  %483 = vmatpush1.msra.mxu0 %v456
  %484 = vmatprep.subr.mxu0 0.0
  %485 = vmatpush1.msra.mxu0 %v457
  %486 = vmatprep.subr.mxu0 0.0
  %487 = vmatpush1.msra.mxu0 %v458
  %488 = vmatprep.subr.mxu0 0.0
  %489 = vmatpush1.msra.mxu0 %v459
  %490 = vmatprep.subr.mxu0 0.0
  %491 = vmatpush1.msra.mxu0 %v460
  %492 = vmatprep.subr.mxu0 0.0
  %493 = vmatpush1.msra.mxu0 %v461
  %494 = vmatprep.subr.mxu0 0.0
  %495 = vmatpush1.msra.mxu0 0.0
  %496 = vmatprep.subr.mxu0 0.0
  %497 = vmatpush1.msra.mxu0 0.0
  %498 = vmatprep.subr.mxu0 0.0
  %499 = vmatpush1.msra.mxu0 0.0
  %500 = vmatprep.subr.mxu0 0.0
  %501 = vmatpush1.msra.mxu0 0.0
  %502 = vmatprep.subr.mxu0 0.0
  %503 = vmatpush1.msra.mxu0 0.0
  %504 = vmatprep.subr.mxu0 0.0
  %505 = vmatpush1.msra.mxu0 0.0
  %506 = vmatprep.subr.mxu0 0.0
  %507 = vmatpush1.msra.mxu0 0.0
  %508 = vmatprep.subr.mxu0 0.0
  %509 = vmatpush1.msra.mxu0 0.0
  %510 = vmatprep.subr.mxu0 0.0
  %511 = vmatpush1.msra.mxu0 0.0
  %512 = vmatprep.subr.mxu0 0.0
  %513 = vmatpush1.msra.mxu0 0.0
  %514 = vmatprep.subr.mxu0 0.0
  %515 = vmatpush1.msra.mxu0 0.0
  %516 = vmatprep.subr.mxu0 0.0
  %517 = vmatpush1.msra.mxu0 0.0
  %518 = vmatprep.subr.mxu0 0.0
  %519 = vmatpush1.msra.mxu0 0.0
  %520 = vmatprep.subr.mxu0 0.0
  %521 = vmatpush1.msra.mxu0 0.0
  %522 = vmatprep.subr.mxu0 0.0
  %523 = vmatpush1.msra.mxu0 0.0
  %524 = vmatprep.subr.mxu0 0.0
  %525 = vmatpush1.msra.mxu0 0.0
  %526 = vmatprep.mubr.f32.mxu0 0.0
  %527 = vmatmul.mubr.f32.gmra.mrb[0].mxu0 %v432
  %v528 = vpop.f32.mrb[0].mxu0
  %v529 = vadd.f32 0.0, %v528
  %v530 = vpop.f32.mrb[0].mxu0
  %531 = vdwg.mxu0
  %532 = vmatprep.subr.mxu0 0.0
  %533 = vmatpush1.msra.mxu0 %v446
  %534 = vmatprep.subr.mxu0 0.0
  %535 = vmatpush1.msra.mxu0 %v447
  %536 = vmatprep.subr.mxu0 0.0
  %537 = vmatpush1.msra.mxu0 %v448
  %538 = vmatprep.subr.mxu0 0.0
  %539 = vmatpush1.msra.mxu0 %v449
  %540 = vmatprep.subr.mxu0 0.0
  %541 = vmatpush1.msra.mxu0 %v450
  %542 = vmatprep.subr.mxu0 0.0
  %543 = vmatpush1.msra.mxu0 %v451
  %544 = vmatprep.subr.mxu0 0.0
  %545 = vmatpush1.msra.mxu0 %v452
  %546 = vmatprep.subr.mxu0 0.0
  %547 = vmatpush1.msra.mxu0 %v453
  %548 = vmatprep.subr.mxu0 0.0
  %549 = vmatpush1.msra.mxu0 %v454
  %550 = vmatprep.subr.mxu0 0.0
  %551 = vmatpush1.msra.mxu0 %v455
  %552 = vmatprep.subr.mxu0 0.0
  %553 = vmatpush1.msra.mxu0 %v456
  %554 = vmatprep.subr.mxu0 0.0
  %555 = vmatpush1.msra.mxu0 %v457
  %556 = vmatprep.subr.mxu0 0.0
  %557 = vmatpush1.msra.mxu0 %v458
  %558 = vmatprep.subr.mxu0 0.0
  %559 = vmatpush1.msra.mxu0 %v459
  %560 = vmatprep.subr.mxu0 0.0
  %561 = vmatpush1.msra.mxu0 %v460
  %562 = vmatprep.subr.mxu0 0.0
  %563 = vmatpush1.msra.mxu0 %v461
  %564 = vmatprep.subr.mxu0 0.0
  %565 = vmatpush1.msra.mxu0 0.0
  %566 = vmatprep.subr.mxu0 0.0
  %567 = vmatpush1.msra.mxu0 0.0
  %568 = vmatprep.subr.mxu0 0.0
  %569 = vmatpush1.msra.mxu0 0.0
  %570 = vmatprep.subr.mxu0 0.0
  %571 = vmatpush1.msra.mxu0 0.0
  %572 = vmatprep.subr.mxu0 0.0
  %573 = vmatpush1.msra.mxu0 0.0
  %574 = vmatprep.subr.mxu0 0.0
  %575 = vmatpush1.msra.mxu0 0.0
  %576 = vmatprep.subr.mxu0 0.0
  %577 = vmatpush1.msra.mxu0 0.0
  %578 = vmatprep.subr.mxu0 0.0
  %579 = vmatpush1.msra.mxu0 0.0
  %580 = vmatprep.subr.mxu0 0.0
  %581 = vmatpush1.msra.mxu0 0.0
  %582 = vmatprep.subr.mxu0 0.0
  %583 = vmatpush1.msra.mxu0 0.0
  %584 = vmatprep.subr.mxu0 0.0
  %585 = vmatpush1.msra.mxu0 0.0
  %586 = vmatprep.subr.mxu0 0.0
  %587 = vmatpush1.msra.mxu0 0.0
  %588 = vmatprep.subr.mxu0 0.0
  %589 = vmatpush1.msra.mxu0 0.0
  %590 = vmatprep.subr.mxu0 0.0
  %591 = vmatpush1.msra.mxu0 0.0
  %592 = vmatprep.subr.mxu0 0.0
  %593 = vmatpush1.msra.mxu0 0.0
  %594 = vmatprep.subr.mxu0 0.0
  %595 = vmatpush1.msra.mxu0 0.0
  %596 = vmatprep.mubr.f32.mxu0 0.0
  %597 = vmatmul.mubr.f32.gmra.mrb[0].mxu0 %v445
  %v598 = vpop.f32.mrb[0].mxu0
  %v599 = vadd.f32 0.0, %v598
  %v600 = vpop.f32.mrb[0].mxu0
  %601 = vdwg.mxu0
  %v602 = vmul.f32 %v529, %v529
  %v603 = vsub.f32 %v599, %v602
  %v604 = vadd.f32 %v603, 1e-05
  %v605 = vrsqrt.pop %v604
  %v606 = vld [vmem:[%s5] sm:$0x1]
  %v607 = vmul.f32 %v605, %v606
  %v608 = vld [vmem:[%s6] sm:$0x1]
  %v609 = vmul.f32 %v529, %v607
  %v610 = vsub.f32 %v608, %v609
  %v611 = vlaneseq
  %v612 = vshrl.u32 %v611, 7
  %v613 = vsub.s32 0, %v612
  %v614 = vrot.slane %v607, %v613
  %v615 = vmul.f32 %v420, %v614
  %v616 = vmul.f32 %v421, %v614
  %v617 = vmul.f32 %v422, %v614
  %v618 = vmul.f32 %v423, %v614
  %v620 = vlaneseq
  %v621 = vshrl.u32 %v620, 7
  %v622 = vsub.s32 0, %v621
  %v623 = vrot.slane %v610, %v622
  %v625 = vadd.f32 %v615, %v623
  %v626 = vadd.f32 %v616, %v623
  %v627 = vadd.f32 %v617, %v623
  %v628 = vadd.f32 %v618, %v623
  %629 = vst [vmem:[%s7] sm:$0xff] %v625
  %630 = vst [vmem:[%s7 + $0x8] sm:$0xff] %v626
  %631 = vst [vmem:[%s7 + $0x10] sm:$0xff] %v627
  %632 = vst [vmem:[%s7 + $0x18] sm:$0xff] %v628
  // Predicated region
  $region30: #{mconv_norm_forward.1} parent=0 // pred_check
    _
  $region31: #{mconv_norm_forward.1} parent=0 // pred_check_branch
    %634 = sbr.rel (0) target = $region33
  $region32: #{mconv_norm_forward.1} parent=0 // pred_region
    _
  $region33: #{mconv_norm_forward.1} parent=0 // pred_fallthru
    _
  // Predicated region
  $region34: #{mconv_norm_forward.1} parent=0 // pred_check
    _
  $region35: #{mconv_norm_forward.1} parent=0 // pred_check_branch
    %636 = sbr.rel (0) target = $region37
  $region36: #{mconv_norm_forward.1} parent=0 // pred_region
    _
  $region37: #{mconv_norm_forward.1} parent=0 // pred_fallthru
    _

</llo_original>
